<compile_context>
chip_gen: v7x
topology: tpu7x:2x2x1
jax: 0.10.0
libtpu: 0.0.40
codegen_flags: <defaults>
</compile_context>

<pallas_src>
import math
import jax
import jax.numpy as jnp
from jax.experimental import pallas as pl
from jax.experimental.pallas import tpu as pltpu

IN_F, HID, OUT_F = 2, 4, 1


def relu_mlp_kernel(w1_ref, b1_ref, w2_ref, b2_ref, xT_ref, oT_ref):
    # xT_ref: (IN_F, Bt) f32 VMEM tile, batch on lanes.
    # w1_ref: (IN_F*HID,) SMEM, row-major (in, hid): w1[i*HID + j]
    # b1_ref: (HID,) SMEM ; w2_ref: (HID,) SMEM ; b2_ref: (OUT_F,) SMEM.
    xT = xT_ref[...]
    x0 = xT[0:1, :]                       # (1, Bt)
    x1 = xT[1:2, :]                       # (1, Bt)
    acc = jnp.zeros_like(x0)              # (1, Bt) f32 accumulator
    for j in range(HID):                  # fully unrolled VPU broadcast-FMAs
        h = x0 * w1_ref[0 * HID + j] + x1 * w1_ref[1 * HID + j] + b1_ref[j]
        h = jnp.maximum(h, 0.0)           # ReLU
        acc = acc + h * w2_ref[j]
    oT_ref[...] = (acc + b2_ref[0]).astype(oT_ref.dtype)


def _round_up(n, m):
    return ((n + m - 1) // m) * m


def relu_mlp(x, w1, b1, w2, b2, *, max_block_b=512):
    """x: (B, 2) f32; w1: (2, 4); b1: (4,); w2: (4, 1); b2: (1,). Returns (B, 1)."""
    B = x.shape[0]
    Bt = min(max_block_b, _round_up(B, 128))        # lane-aligned batch tile
    B_pad = _round_up(B, Bt)
    # Put batch on the lane axis and pad it to a whole number of tiles.
    xT = jnp.pad(x.T, ((0, 0), (0, B_pad - B)))     # (IN_F, B_pad)
    grid = (B_pad // Bt,)

    cost = pl.CostEstimate(
        flops=B_pad * (2 * IN_F * HID + 2 * HID * OUT_F + HID),
        transcendentals=0,
        bytes_accessed=(xT.size + B_pad * OUT_F
                        + w1.size + b1.size + w2.size + b2.size) * 4,
    )

    outT = pl.pallas_call(
        relu_mlp_kernel,
        out_shape=jax.ShapeDtypeStruct((OUT_F, B_pad), x.dtype),
        grid=grid,
        in_specs=[
            pl.BlockSpec(memory_space=pltpu.MemorySpace.SMEM),   # w1 (flat)
            pl.BlockSpec(memory_space=pltpu.MemorySpace.SMEM),   # b1
            pl.BlockSpec(memory_space=pltpu.MemorySpace.SMEM),   # w2 (flat)
            pl.BlockSpec(memory_space=pltpu.MemorySpace.SMEM),   # b2
            pl.BlockSpec((IN_F, Bt), lambda i: (0, i)),          # x^T tile
        ],
        out_specs=pl.BlockSpec((OUT_F, Bt), lambda i: (0, i)),   # y^T tile (lane-dense)
        compiler_params=pltpu.CompilerParams(
            dimension_semantics=("parallel",)),                  # megacore split on v7x
        cost_estimate=cost,
    )(w1.reshape(-1), b1.reshape(-1), w2.reshape(-1), b2.reshape(-1), xT)

    return outT[0, :B].reshape(B, 1)


def init_params(key):
    """Deterministic init mimicking nn.Linear's uniform(-1/sqrt(fan_in), ...)."""
    k1, k2, k3, k4 = jax.random.split(key, 4)
    bound1 = 1.0 / math.sqrt(2.0)   # fan_in = 2
    bound2 = 1.0 / math.sqrt(4.0)   # fan_in = 4
    # Stored as (in, out) = transpose of PyTorch's (out, in) layout.
    w1 = jax.random.uniform(k1, (IN_F, HID), jnp.float32, -bound1, bound1)
    b1 = jax.random.uniform(k2, (HID,), jnp.float32, -bound1, bound1)
    w2 = jax.random.uniform(k3, (HID, OUT_F), jnp.float32, -bound2, bound2)
    b2 = jax.random.uniform(k4, (OUT_F,), jnp.float32, -bound2, bound2)
    return w1, b1, w2, b2


def reference(x, w1, b1, w2, b2):
    h = jnp.maximum(x @ w1 + b1, 0.0)
    return h @ w2 + b2


if __name__ == "__main__":
    key = jax.random.PRNGKey(0)
    kx, kp = jax.random.split(key)
    batch = 8
    x = jax.random.normal(kx, (batch, IN_F), jnp.float32)
    w1, b1, w2, b2 = init_params(kp)

    out = jax.block_until_ready(relu_mlp(x, w1, b1, w2, b2))

    ref = reference(x, w1, b1, w2, b2)
    assert out.shape == (batch, 1), out.shape
    assert jnp.allclose(out, ref, atol=1e-5, rtol=1e-5), (out, ref)
    print("KERNEL_OK")
</pallas_src>

<mosaic_0001>
module attributes {stable_mosaic.version = 11 : i64} {
  func.func @relu_mlp_kernel(%arg0: i32, %arg1: memref<8xf32, #tpu.memory_space<smem>>, %arg2: memref<4xf32, #tpu.memory_space<smem>>, %arg3: memref<4xf32, #tpu.memory_space<smem>>, %arg4: memref<1xf32, #tpu.memory_space<smem>>, %arg5: memref<2x128xf32, #tpu.memory_space<vmem>>, %arg6: memref<1x128xf32, #tpu.memory_space<vmem>>) attributes {dimension_semantics = [#tpu.dimension_semantics<parallel>], iteration_bounds = array<i64: 1>, scalar_prefetch = 0 : i64, scratch_operands = 0 : i64, tpu.core_type = #tpu.core_type<tc>, window_params = [{transform_indices = @transform_0, window_bounds = array<i64: 8>}, {transform_indices = @transform_1, window_bounds = array<i64: 4>}, {transform_indices = @transform_2, window_bounds = array<i64: 4>}, {transform_indices = @transform_3, window_bounds = array<i64: 1>}, {transform_indices = @transform_4, window_bounds = array<i64: 2, 128>}, {transform_indices = @transform_5, window_bounds = array<i64: 1, 128>}]} {
    %c0 = arith.constant 0 : index
    %c0_0 = arith.constant 0 : index
    %0 = vector.load %arg5[%c0, %c0_0] : memref<2x128xf32, #tpu.memory_space<vmem>>, vector<2x128xf32>
    %1 = vector.extract_strided_slice %0 {offsets = [0, 0], sizes = [1, 128], strides = [1, 1]} : vector<2x128xf32> to vector<1x128xf32>
    %2 = vector.extract_strided_slice %0 {offsets = [1, 0], sizes = [1, 128], strides = [1, 1]} : vector<2x128xf32> to vector<1x128xf32>
    %cst = arith.constant 0.000000e+00 : f32
    %3 = vector.broadcast %cst : f32 to vector<1x128xf32>
    %c0_1 = arith.constant 0 : index
    %4 = memref.load %arg1[%c0_1] : memref<8xf32, #tpu.memory_space<smem>>
    %5 = vector.broadcast %4 : f32 to vector<1x128xf32>
    %6 = arith.mulf %1, %5 : vector<1x128xf32>
    %c4 = arith.constant 4 : index
    %7 = memref.load %arg1[%c4] : memref<8xf32, #tpu.memory_space<smem>>
    %8 = vector.broadcast %7 : f32 to vector<1x128xf32>
    %9 = arith.mulf %2, %8 : vector<1x128xf32>
    %10 = arith.addf %6, %9 : vector<1x128xf32>
    %c0_2 = arith.constant 0 : index
    %11 = memref.load %arg2[%c0_2] : memref<4xf32, #tpu.memory_space<smem>>
    %12 = vector.broadcast %11 : f32 to vector<1x128xf32>
    %13 = arith.addf %10, %12 : vector<1x128xf32>
    %cst_3 = arith.constant 0.000000e+00 : f32
    %14 = vector.broadcast %cst_3 : f32 to vector<1x128xf32>
    %15 = arith.maximumf %13, %14 : vector<1x128xf32>
    %c0_4 = arith.constant 0 : index
    %16 = memref.load %arg3[%c0_4] : memref<4xf32, #tpu.memory_space<smem>>
    %17 = vector.broadcast %16 : f32 to vector<1x128xf32>
    %18 = arith.mulf %15, %17 : vector<1x128xf32>
    %19 = arith.addf %3, %18 : vector<1x128xf32>
    %c1 = arith.constant 1 : index
    %20 = memref.load %arg1[%c1] : memref<8xf32, #tpu.memory_space<smem>>
    %21 = vector.broadcast %20 : f32 to vector<1x128xf32>
    %22 = arith.mulf %1, %21 : vector<1x128xf32>
    %c5 = arith.constant 5 : index
    %23 = memref.load %arg1[%c5] : memref<8xf32, #tpu.memory_space<smem>>
    %24 = vector.broadcast %23 : f32 to vector<1x128xf32>
    %25 = arith.mulf %2, %24 : vector<1x128xf32>
    %26 = arith.addf %22, %25 : vector<1x128xf32>
    %c1_5 = arith.constant 1 : index
    %27 = memref.load %arg2[%c1_5] : memref<4xf32, #tpu.memory_space<smem>>
    %28 = vector.broadcast %27 : f32 to vector<1x128xf32>
    %29 = arith.addf %26, %28 : vector<1x128xf32>
    %cst_6 = arith.constant 0.000000e+00 : f32
    %30 = vector.broadcast %cst_6 : f32 to vector<1x128xf32>
    %31 = arith.maximumf %29, %30 : vector<1x128xf32>
    %c1_7 = arith.constant 1 : index
    %32 = memref.load %arg3[%c1_7] : memref<4xf32, #tpu.memory_space<smem>>
    %33 = vector.broadcast %32 : f32 to vector<1x128xf32>
    %34 = arith.mulf %31, %33 : vector<1x128xf32>
    %35 = arith.addf %19, %34 : vector<1x128xf32>
    %c2 = arith.constant 2 : index
    %36 = memref.load %arg1[%c2] : memref<8xf32, #tpu.memory_space<smem>>
    %37 = vector.broadcast %36 : f32 to vector<1x128xf32>
    %38 = arith.mulf %1, %37 : vector<1x128xf32>
    %c6 = arith.constant 6 : index
    %39 = memref.load %arg1[%c6] : memref<8xf32, #tpu.memory_space<smem>>
    %40 = vector.broadcast %39 : f32 to vector<1x128xf32>
    %41 = arith.mulf %2, %40 : vector<1x128xf32>
    %42 = arith.addf %38, %41 : vector<1x128xf32>
    %c2_8 = arith.constant 2 : index
    %43 = memref.load %arg2[%c2_8] : memref<4xf32, #tpu.memory_space<smem>>
    %44 = vector.broadcast %43 : f32 to vector<1x128xf32>
    %45 = arith.addf %42, %44 : vector<1x128xf32>
    %cst_9 = arith.constant 0.000000e+00 : f32
    %46 = vector.broadcast %cst_9 : f32 to vector<1x128xf32>
    %47 = arith.maximumf %45, %46 : vector<1x128xf32>
    %c2_10 = arith.constant 2 : index
    %48 = memref.load %arg3[%c2_10] : memref<4xf32, #tpu.memory_space<smem>>
    %49 = vector.broadcast %48 : f32 to vector<1x128xf32>
    %50 = arith.mulf %47, %49 : vector<1x128xf32>
    %51 = arith.addf %35, %50 : vector<1x128xf32>
    %c3 = arith.constant 3 : index
    %52 = memref.load %arg1[%c3] : memref<8xf32, #tpu.memory_space<smem>>
    %53 = vector.broadcast %52 : f32 to vector<1x128xf32>
    %54 = arith.mulf %1, %53 : vector<1x128xf32>
    %c7 = arith.constant 7 : index
    %55 = memref.load %arg1[%c7] : memref<8xf32, #tpu.memory_space<smem>>
    %56 = vector.broadcast %55 : f32 to vector<1x128xf32>
    %57 = arith.mulf %2, %56 : vector<1x128xf32>
    %58 = arith.addf %54, %57 : vector<1x128xf32>
    %c3_11 = arith.constant 3 : index
    %59 = memref.load %arg2[%c3_11] : memref<4xf32, #tpu.memory_space<smem>>
    %60 = vector.broadcast %59 : f32 to vector<1x128xf32>
    %61 = arith.addf %58, %60 : vector<1x128xf32>
    %cst_12 = arith.constant 0.000000e+00 : f32
    %62 = vector.broadcast %cst_12 : f32 to vector<1x128xf32>
    %63 = arith.maximumf %61, %62 : vector<1x128xf32>
    %c3_13 = arith.constant 3 : index
    %64 = memref.load %arg3[%c3_13] : memref<4xf32, #tpu.memory_space<smem>>
    %65 = vector.broadcast %64 : f32 to vector<1x128xf32>
    %66 = arith.mulf %63, %65 : vector<1x128xf32>
    %67 = arith.addf %51, %66 : vector<1x128xf32>
    %c0_14 = arith.constant 0 : index
    %68 = memref.load %arg4[%c0_14] : memref<1xf32, #tpu.memory_space<smem>>
    %69 = vector.broadcast %68 : f32 to vector<1x128xf32>
    %70 = arith.addf %67, %69 : vector<1x128xf32>
    %c0_15 = arith.constant 0 : index
    %c0_16 = arith.constant 0 : index
    %71 = vector.load %arg6[%c0_15, %c0_16] : memref<1x128xf32, #tpu.memory_space<vmem>>, vector<1x128xf32>
    tpu.vector_store %arg6[%c0_15, %c0_16], %70 {strides = array<i32>} : memref<1x128xf32, #tpu.memory_space<vmem>>, vector<1x128xf32>,
    return
  }
  func.func @transform_0(%arg0: i32) -> i32 {
    %c0_i32 = arith.constant 0 : i32
    %c0_i32_0 = arith.constant 0 : i32
    return %c0_i32 : i32
  }
  func.func @transform_1(%arg0: i32) -> i32 {
    %c0_i32 = arith.constant 0 : i32
    %c0_i32_0 = arith.constant 0 : i32
    return %c0_i32 : i32
  }
  func.func @transform_2(%arg0: i32) -> i32 {
    %c0_i32 = arith.constant 0 : i32
    %c0_i32_0 = arith.constant 0 : i32
    return %c0_i32 : i32
  }
  func.func @transform_3(%arg0: i32) -> i32 {
    %c0_i32 = arith.constant 0 : i32
    %c0_i32_0 = arith.constant 0 : i32
    return %c0_i32 : i32
  }
  func.func @transform_4(%arg0: i32) -> (i32, i32) {
    %c0_i32 = arith.constant 0 : i32
    %c0_i32_0 = arith.constant 0 : i32
    return %c0_i32, %arg0 : i32, i32
  }
  func.func @transform_5(%arg0: i32) -> (i32, i32) {
    %c0_i32 = arith.constant 0 : i32
    %c0_i32_0 = arith.constant 0 : i32
    return %c0_i32, %arg0 : i32, i32
  }
}

</mosaic_0001>

<llo_original>
// kernel: tpu_custom_call.1
$region0: #{tpu_custom_call.1}
  #allocation0 [shape = 'u32[]', space=smem, size = 0x4, offset = 0x4, fixed_abs, tag = 'smem constant byte address 0x4 - core index']
  #allocation1 [shape = 'u32[144,128]{1,0:T(1,128)}', space=vmem, size = 0x12000, scoped, tag = 'internal scratch']
  #allocation2 [shape = 'f32[1]{0:T(128)S(6)}', space=smem, size = 0x200, scoped, tag = 'scoped memory for tpu_custom_call.1']
  %s0 = inlined_call_operand.vmem [shape: f32[8], index: 0, kind: input, shape index: {}]
  %s1 = inlined_call_operand.vmem [shape: f32[4], index: 1, kind: input, shape index: {}]
  %s2 = inlined_call_operand.vmem [shape: f32[4], index: 2, kind: input, shape index: {}]
  %s3 = inlined_call_operand.<no memory space> [shape: f32[1], index: 3, kind: input, shape index: {}]
  %s4 = inlined_call_operand.vmem [shape: f32[2,128], index: 4, kind: input, shape index: {}]
  %s5 = inlined_call_operand.hbm [shape: f32[1,128], index: 5, kind: output, shape index: {}]
  %s6 = sld [smem:[#allocation0]]
  $region42: #{tpu_custom_call.1} parent=0
    _
  %s8 = ssub.s32 1, %s6
  %s9 = scalar_select 0, %s8, %s6
  %10 = sst [smem:[#allocation2]] %s3
  $region1: #{tpu_custom_call.1} parent=0
    #allocation3 [shape = 'u8[512]{0}', space=smem, size = 0x200, scoped, tag = 'input window, operand 0, single buffered']
    #allocation4 [shape = 's32[1]{0}', space=sflag, size = 0x4, scoped, tag = 'scoped memory for tpu_custom_call.1']
    #allocation5 [shape = 's32[1]{0}', space=sflag, size = 0x4, scoped, tag = 'scoped memory for tpu_custom_call.1']
    #allocation6 [shape = 'u8[512]{0}', space=smem, size = 0x200, scoped, tag = 'input window, operand 1, single buffered']
    #allocation7 [shape = 's32[1]{0}', space=sflag, size = 0x4, scoped, tag = 'scoped memory for tpu_custom_call.1']
    #allocation8 [shape = 'u8[512]{0}', space=smem, size = 0x200, scoped, tag = 'input window, operand 2, single buffered']
    #allocation9 [shape = 'u8[512]{0}', space=vmem, size = 0x400, scoped, tag = 'output window, operand 0, single buffered']
    %11 = vsyncpa [#allocation5], 0
    %12 = vsyncpa [#allocation7], 0
    %13 = vsyncpa [#allocation4], 0
    // Predicated region
    $region2: #{tpu_custom_call.1} parent=1 // pred_check
      _
    $region3: #{tpu_custom_call.1} parent=1 // pred_check_branch
      %15 = sbr.rel (0) target = $region5
    $region4: #{tpu_custom_call.1} parent=1 // pred_region
      %s17 = ssub.s32 16, 16
      %18 = vsyncadd [#allocation5], %s17
      %s20 = sshll.u32 %s0, 4
      %s21 = int_to_ptr.vmem [resolvable:$true] %s20
      %23 = dma.vmem_to_smem %s21, 16, [#allocation3], [#allocation5]
    $region5: #{tpu_custom_call.1} parent=1 // pred_fallthru
      _
    // Predicated region
    $region6: #{tpu_custom_call.1} parent=1 // pred_check
      _
    $region7: #{tpu_custom_call.1} parent=1 // pred_check_branch
      %25 = sbr.rel (0) target = $region9
    $region8: #{tpu_custom_call.1} parent=1 // pred_region
      %s27 = ssub.s32 16, 16
      %28 = vsyncadd [#allocation7], %s27
      %s30 = sshll.u32 %s1, 4
      %s31 = int_to_ptr.vmem [resolvable:$true] %s30
      %33 = dma.vmem_to_smem %s31, 16, [#allocation6], [#allocation7]
    $region9: #{tpu_custom_call.1} parent=1 // pred_fallthru
      _
    // Predicated region
    $region10: #{tpu_custom_call.1} parent=1 // pred_check
      _
    $region11: #{tpu_custom_call.1} parent=1 // pred_check_branch
      %35 = sbr.rel (0) target = $region13
    $region12: #{tpu_custom_call.1} parent=1 // pred_region
      %s37 = ssub.s32 16, 16
      %38 = vsyncadd [#allocation7], %s37
      %s40 = sshll.u32 %s2, 4
      %s41 = int_to_ptr.vmem [resolvable:$true] %s40
      %43 = dma.vmem_to_smem %s41, 16, [#allocation8], [#allocation7]
    $region13: #{tpu_custom_call.1} parent=1 // pred_fallthru
      _
    // Predicated region
    $region14: #{tpu_custom_call.1} parent=1 // pred_check
      _
    $region15: #{tpu_custom_call.1} parent=1 // pred_check_branch
      %45 = sbr.rel (0) target = $region17
    $region16: #{tpu_custom_call.1} parent=1 // pred_region
      _
    $region17: #{tpu_custom_call.1} parent=1 // pred_fallthru
      _
    // Predicated region
    $region18: #{tpu_custom_call.1} parent=1 // pred_check
      _
    $region19: #{tpu_custom_call.1} parent=1 // pred_check_branch
      %47 = sbr.rel (0) target = $region21
    $region20: #{tpu_custom_call.1} parent=1 // pred_region
      _
    $region21: #{tpu_custom_call.1} parent=1 // pred_fallthru
      _
    // Predicated region
    $region22: #{tpu_custom_call.1} parent=1 // pred_check
      _
    $region23: #{tpu_custom_call.1} parent=1 // pred_check_branch
      %49 = sbr.rel (0) target = $region25
    $region24: #{tpu_custom_call.1} parent=1 // pred_region
      %50 = dma.done [#allocation5], 16
    $region25: #{tpu_custom_call.1} parent=1 // pred_fallthru
      _
    // Predicated region
    $region26: #{tpu_custom_call.1} parent=1 // pred_check
      _
    $region27: #{tpu_custom_call.1} parent=1 // pred_check_branch
      %52 = sbr.rel (0) target = $region29
    $region28: #{tpu_custom_call.1} parent=1 // pred_region
      %53 = dma.done [#allocation7], 16
    $region29: #{tpu_custom_call.1} parent=1 // pred_fallthru
      _
    // Predicated region
    $region30: #{tpu_custom_call.1} parent=1 // pred_check
      _
    $region31: #{tpu_custom_call.1} parent=1 // pred_check_branch
      %55 = sbr.rel (0) target = $region33
    $region32: #{tpu_custom_call.1} parent=1 // pred_region
      %56 = dma.done [#allocation7], 16
    $region33: #{tpu_custom_call.1} parent=1 // pred_fallthru
      _
    %57 = sfence
    %v58 = vld [vmem:[%s4] sm:$0x3]
    %s59 = sld [smem:[#allocation3]]
    %v60 = vstv %s59
    %v61 = vmul.f32 %v58, %v60
    %s62 = sld [smem:[#allocation3 + $0x4]]
    %v63 = vstv %s62
    %v64 = vmul.f32 %v58, %v63
    %v66 = vrot.slane %v64, 1
    %v68 = vadd.f32 %v61, %v66
    %s69 = sld [smem:[#allocation6]]
    %v70 = vstv %s69
    %v71 = vadd.f32 %v68, %v70
    %v72 = vmax.f32 %v71, 0.0
    %s73 = sld [smem:[#allocation8]]
    %v74 = vstv %s73
    %v75 = vmul.f32 %v72, %v74
    %v76 = vadd.f32 %v75, 0.0
    %s77 = sld [smem:[#allocation3 + $0x1]]
    %v78 = vstv %s77
    %v79 = vmul.f32 %v58, %v78
    %s80 = sld [smem:[#allocation3 + $0x5]]
    %v81 = vstv %s80
    %v82 = vmul.f32 %v58, %v81
    %v84 = vrot.slane %v82, 1
    %v86 = vadd.f32 %v79, %v84
    %s87 = sld [smem:[#allocation6 + $0x1]]
    %v88 = vstv %s87
    %v89 = vadd.f32 %v86, %v88
    %v90 = vmax.f32 %v89, 0.0
    %s91 = sld [smem:[#allocation8 + $0x1]]
    %v92 = vstv %s91
    %v93 = vmul.f32 %v90, %v92
    %v94 = vadd.f32 %v76, %v93
    %s95 = sld [smem:[#allocation3 + $0x2]]
    %v96 = vstv %s95
    %v97 = vmul.f32 %v58, %v96
    %s98 = sld [smem:[#allocation3 + $0x6]]
    %v99 = vstv %s98
    %v100 = vmul.f32 %v58, %v99
    %v102 = vrot.slane %v100, 1
    %v104 = vadd.f32 %v97, %v102
    %s105 = sld [smem:[#allocation6 + $0x2]]
    %v106 = vstv %s105
    %v107 = vadd.f32 %v104, %v106
    %v108 = vmax.f32 %v107, 0.0
    %s109 = sld [smem:[#allocation8 + $0x2]]
    %v110 = vstv %s109
    %v111 = vmul.f32 %v108, %v110
    %v112 = vadd.f32 %v94, %v111
    %s113 = sld [smem:[#allocation3 + $0x3]]
    %v114 = vstv %s113
    %v115 = vmul.f32 %v58, %v114
    %s116 = sld [smem:[#allocation3 + $0x7]]
    %v117 = vstv %s116
    %v118 = vmul.f32 %v58, %v117
    %v120 = vrot.slane %v118, 1
    %v122 = vadd.f32 %v115, %v120
    %s123 = sld [smem:[#allocation6 + $0x3]]
    %v124 = vstv %s123
    %v125 = vadd.f32 %v122, %v124
    %v126 = vmax.f32 %v125, 0.0
    %s127 = sld [smem:[#allocation8 + $0x3]]
    %v128 = vstv %s127
    %v129 = vmul.f32 %v126, %v128
    %v130 = vadd.f32 %v112, %v129
    %s131 = sld [smem:[#allocation2]]
    %v132 = vstv %s131
    %v133 = vadd.f32 %v130, %v132
    %134 = vst [vmem:[#allocation9] sm:$0x1] %v133
    // Predicated region
    $region34: #{tpu_custom_call.1} parent=1 // pred_check
      _
    $region35: #{tpu_custom_call.1} parent=1 // pred_check_branch
      %136 = sbr.rel (0) target = $region37
    $region36: #{tpu_custom_call.1} parent=1 // pred_region
      %s138 = ssub.s32 16, 16
      %139 = vsyncadd [#allocation4], %s138
      %s141 = sshll.u32 [#allocation9], 4
      %s142 = int_to_ptr.vmem [resolvable:$true] %s141
      %144 = dma.vmem_to_hbm [thread:$0]  %s142, 16, %s5, [#allocation4]
    $region37: #{tpu_custom_call.1} parent=1 // pred_fallthru
      _
    // Predicated region
    $region38: #{tpu_custom_call.1} parent=1 // pred_check
      _
    $region39: #{tpu_custom_call.1} parent=1 // pred_check_branch
      %146 = sbr.rel (0) target = $region41
    $region40: #{tpu_custom_call.1} parent=1 // pred_region
      %147 = dma.done [#allocation4], 16
    $region41: #{tpu_custom_call.1} parent=1 // pred_fallthru
      _
    %148 = vsyncpa [#allocation4], 1
    %149 = vsyncpa [#allocation5], 1
    %150 = vsyncpa [#allocation7], 1

</llo_original>
